<compile_context>
chip_gen: v5e
topology: v5e:2x2
jax: 0.10.0
libtpu: 0.0.40
codegen_flags: <defaults>
</compile_context>

<pallas_src>
import functools

import jax
import jax.numpy as jnp
import numpy as np
from jax.experimental import pallas as pl
from jax.experimental.pallas import tpu as pltpu


# ----------------------------- Pallas kernels -----------------------------

def _build_im2col(x_ref, a_ref, *, kernel_size, dilation, pad, c_in,
                  l_in, l_out):
    """Assemble the (l_out, K*C_in) im2col tile in VMEM.

    The 'same' zero padding of the sequence is realized here: for each tap k,
    rows that would read outside [0, l_in) are zero-filled, the rest copy a
    contiguous slab straight from the x block. All bounds are static.
    """
    for k in range(kernel_size):
        c0 = k * c_in
        c1 = c0 + c_in
        lo = min(max(0, pad - k * dilation), l_out)            # leading zeros
        hi = max(lo, min(l_out, l_in + pad - k * dilation))    # valid rows end
        src = lo + k * dilation - pad                          # = max(0, k*d - pad)
        if lo > 0:
            a_ref[0:lo, c0:c1] = jnp.zeros((lo, c_in), jnp.float32)
        if hi > lo:
            a_ref[lo:hi, c0:c1] = x_ref[0, src:src + (hi - lo), :]
        if hi < l_out:
            a_ref[hi:l_out, c0:c1] = jnp.zeros((l_out - hi, c_in), jnp.float32)


def _stats_kernel(x_ref, w_ref, b_ref, stats_ref, a_ref, *,
                  kernel_size, dilation, pad, l_in, l_out):
    # x_ref:     (1, L, C_in)       one batch, auto-pipelined from HBM
    # w_ref:     (K*C_in, C_out)    fused conv taps
    # b_ref:     (1, C_out)         conv bias
    # stats_ref: (1, 2, C_out)      per-batch [sum, M2-about-batch-mean]
    # a_ref:     (L_out, K*C_in)    VMEM im2col scratch
    c_in = x_ref.shape[2]
    _build_im2col(x_ref, a_ref, kernel_size=kernel_size, dilation=dilation,
                  pad=pad, c_in=c_in, l_in=l_in, l_out=l_out)
    # One fused MXU matmul (contraction depth K*C_in) + bias; the conv tile
    # lives only in VMEM — it is reduced here, never written to HBM.
    conv = jnp.dot(a_ref[...], w_ref[...],
                   preferred_element_type=jnp.float32) + b_ref[...]
    s = jnp.sum(conv, axis=0, keepdims=True)                   # (1, C_out)
    mean_b = s * (1.0 / l_out)
    d = conv - mean_b
    m2 = jnp.sum(d * d, axis=0, keepdims=True)                 # (1, C_out)
    stats_ref[0, 0:1, :] = s
    stats_ref[0, 1:2, :] = m2


def _apply_kernel(x_ref, w_ref, b_ref, scale_ref, shift_ref, o_ref, a_ref, *,
                  kernel_size, dilation, pad, l_in, l_out):
    # Recompute the conv tile from x (cheaper than a write+read+write of an
    # f32 intermediate) and apply BN; the unpadded final output is written
    # exactly once.
    c_in = x_ref.shape[2]
    _build_im2col(x_ref, a_ref, kernel_size=kernel_size, dilation=dilation,
                  pad=pad, c_in=c_in, l_in=l_in, l_out=l_out)
    conv = jnp.dot(a_ref[...], w_ref[...],
                   preferred_element_type=jnp.float32) + b_ref[...]
    o_ref[0] = conv * scale_ref[...] + shift_ref[...]


# ------------------------------ Host wrapper ------------------------------

@functools.partial(jax.jit, static_argnames=("kernel_size", "dilation"))
def dilconv1d_forward(x, conv_weight, conv_bias, bn_gamma, bn_beta, *,
                      kernel_size, dilation, eps=1e-5):
    """Forward pass of DilConv1D (training-mode BatchNorm, batch stats).

    x:           (B, L, C_in)  float32
    conv_weight: (C_out, C_in, K)  -- PyTorch Conv1d layout
    conv_bias:   (C_out,)
    bn_gamma, bn_beta: (C_out,)
    returns:     (B, L_out, C_out)
    """
    B, L, C_in = x.shape
    C_out = conv_weight.shape[0]
    K = kernel_size
    pad = (K - 1) * dilation // 2
    L_out = L + 2 * pad - (K - 1) * dilation

    # Fuse the K taps into one (K*C_in, C_out) slab for a single deep matmul.
    w_flat = jnp.transpose(conv_weight, (2, 1, 0)).reshape(K * C_in, C_out)
    b_row = conv_bias.reshape(1, C_out)

    kparams = dict(kernel_size=K, dilation=dilation, pad=pad,
                   l_in=L, l_out=L_out)
    # 48 MiB scoped VMEM fits all generations (v7x: 64 MiB physical per TC);
    # on v5e/v6e (128 MiB) this could go higher once L-tiling is added.
    cparams = pltpu.CompilerParams(
        dimension_semantics=("parallel",),
        vmem_limit_bytes=48 * 1024 * 1024)

    # --- Pass 1: per-batch BN partial statistics (conv never hits HBM) -----
    stats = pl.pallas_call(
        functools.partial(_stats_kernel, **kparams),
        out_shape=jax.ShapeDtypeStruct((B, 2, C_out), jnp.float32),
        grid=(B,),
        in_specs=[
            pl.BlockSpec((1, L, C_in), lambda b: (b, 0, 0)),
            pl.BlockSpec((K * C_in, C_out), lambda b: (0, 0)),
            pl.BlockSpec((1, C_out), lambda b: (0, 0)),
        ],
        out_specs=pl.BlockSpec((1, 2, C_out), lambda b: (b, 0, 0)),
        scratch_shapes=[pltpu.VMEM((L_out, K * C_in), jnp.float32)],
        compiler_params=cparams,
    )(x, w_flat, b_row)

    # Chan parallel-variance combine across batches (numerically stable; no
    # E[x^2] - mean^2 cancellation). Tiny (B, 2, C_out) reduction in XLA.
    count = B * L_out
    sums = stats[:, 0, :]                              # (B, C_out)
    m2s = stats[:, 1, :]                               # (B, C_out)
    mean_b = sums / L_out
    mean = jnp.sum(sums, axis=0) / count
    m2 = jnp.sum(m2s, axis=0) + L_out * jnp.sum(
        jnp.square(mean_b - mean[None, :]), axis=0)
    var = m2 / count                                   # biased, as BN uses
    scale = bn_gamma * jax.lax.rsqrt(var + eps)
    shift = bn_beta - mean * scale

    # --- Pass 2: recompute conv, apply BN, write final output once ---------
    y = pl.pallas_call(
        functools.partial(_apply_kernel, **kparams),
        out_shape=jax.ShapeDtypeStruct((B, L_out, C_out), jnp.float32),
        grid=(B,),
        in_specs=[
            pl.BlockSpec((1, L, C_in), lambda b: (b, 0, 0)),
            pl.BlockSpec((K * C_in, C_out), lambda b: (0, 0)),
            pl.BlockSpec((1, C_out), lambda b: (0, 0)),
            pl.BlockSpec((1, C_out), lambda b: (0, 0)),
            pl.BlockSpec((1, C_out), lambda b: (0, 0)),
        ],
        out_specs=pl.BlockSpec((1, L_out, C_out), lambda b: (b, 0, 0)),
        scratch_shapes=[pltpu.VMEM((L_out, K * C_in), jnp.float32)],
        compiler_params=cparams,
    )(x, w_flat, b_row, scale.reshape(1, C_out), shift.reshape(1, C_out))

    return y


# -------------------------------- Reference --------------------------------

def dilconv1d_reference(x, conv_weight, conv_bias, bn_gamma, bn_beta,
                        kernel_size, dilation, eps=1e-5):
    """Pure-JAX reference mirroring the PyTorch forward (training-mode BN)."""
    pad = (kernel_size - 1) * dilation // 2
    w_wio = jnp.transpose(conv_weight, (2, 1, 0))            # (K, C_in, C_out)
    conv = jax.lax.conv_general_dilated(
        x, w_wio, window_strides=(1,), padding=[(pad, pad)],
        rhs_dilation=(dilation,),
        dimension_numbers=("NWC", "WIO", "NWC")) + conv_bias
    mean = jnp.mean(conv, axis=(0, 1))
    var = jnp.mean(jnp.square(conv - mean), axis=(0, 1))
    return (conv - mean) / jnp.sqrt(var + eps) * bn_gamma + bn_beta


# ---------------------------------- Main -----------------------------------

if __name__ == "__main__":
    B, L, C_in, C_out = 2, 18, 8, 8
    kernel_size, dilation = 3, 2

    key = jax.random.PRNGKey(0)
    kx, kw, kb, kg, kbt = jax.random.split(key, 5)

    x = jax.random.normal(kx, (B, L, C_in), dtype=jnp.float32)

    # Deterministic synthetic parameters (PyTorch Conv1d weight layout).
    fan_in = C_in * kernel_size
    bound = 1.0 / np.sqrt(fan_in)
    conv_weight = jax.random.uniform(
        kw, (C_out, C_in, kernel_size), jnp.float32, -bound, bound)
    conv_bias = jax.random.uniform(kb, (C_out,), jnp.float32, -bound, bound)
    bn_gamma = jax.random.uniform(kg, (C_out,), jnp.float32, 0.5, 1.5)
    bn_beta = 0.1 * jax.random.normal(kbt, (C_out,), dtype=jnp.float32)

    y = dilconv1d_forward(x, conv_weight, conv_bias, bn_gamma, bn_beta,
                          kernel_size=kernel_size, dilation=dilation)
    y = jax.block_until_ready(y)

    y_ref = dilconv1d_reference(x, conv_weight, conv_bias, bn_gamma, bn_beta,
                                kernel_size, dilation)
    np.testing.assert_allclose(np.asarray(y), np.asarray(y_ref),
                               rtol=1e-4, atol=1e-4)

    print("KERNEL_OK")
</pallas_src>

<mosaic_0001>
module attributes {stable_mosaic.version = 11 : i64} {
  func.func @_stats_kernel(%arg0: i32, %arg1: memref<1x18x8xf32, #tpu.memory_space<vmem>>, %arg2: memref<24x8xf32, #tpu.memory_space<vmem>>, %arg3: memref<1x8xf32, #tpu.memory_space<vmem>>, %arg4: memref<1x2x8xf32, #tpu.memory_space<vmem>>, %arg5: memref<18x24xf32, #tpu.memory_space<vmem>>) attributes {dimension_semantics = [#tpu.dimension_semantics<parallel>], iteration_bounds = array<i64: 2>, scalar_prefetch = 0 : i64, scratch_operands = 1 : i64, tpu.core_type = #tpu.core_type<tc>, window_params = [{transform_indices = @transform_0, window_bounds = array<i64: 1, 18, 8>}, {pipeline_mode = #tpu.pipeline_mode<synchronous>, transform_indices = @transform_1, window_bounds = array<i64: 24, 8>}, {pipeline_mode = #tpu.pipeline_mode<synchronous>, transform_indices = @transform_2, window_bounds = array<i64: 1, 8>}, {transform_indices = @transform_3, window_bounds = array<i64: 1, 2, 8>}]} {
    %cst = arith.constant 0.000000e+00 : f32
    %0 = vector.broadcast %cst : f32 to vector<2x8xf32>
    %c0 = arith.constant 0 : index
    %c0_0 = arith.constant 0 : index
    %1 = vector.load %arg5[%c0, %c0_0] : memref<18x24xf32, #tpu.memory_space<vmem>>, vector<2x8xf32>
    tpu.vector_store %arg5[%c0, %c0_0], %0 {strides = array<i32>} : memref<18x24xf32, #tpu.memory_space<vmem>>, vector<2x8xf32>,
    %c0_1 = arith.constant 0 : index
    %c0_2 = arith.constant 0 : index
    %c0_3 = arith.constant 0 : index
    %2 = vector.load %arg1[%c0_1, %c0_2, %c0_3] : memref<1x18x8xf32, #tpu.memory_space<vmem>>, vector<1x16x8xf32>
    %3 = vector.shape_cast %2 : vector<1x16x8xf32> to vector<16x8xf32>
    %c2 = arith.constant 2 : index
    %c0_4 = arith.constant 0 : index
    %4 = vector.load %arg5[%c2, %c0_4] : memref<18x24xf32, #tpu.memory_space<vmem>>, vector<16x8xf32>
    tpu.vector_store %arg5[%c2, %c0_4], %3 {strides = array<i32>} : memref<18x24xf32, #tpu.memory_space<vmem>>, vector<16x8xf32>,
    %c0_5 = arith.constant 0 : index
    %c0_6 = arith.constant 0 : index
    %c0_7 = arith.constant 0 : index
    %5 = vector.load %arg1[%c0_5, %c0_6, %c0_7] : memref<1x18x8xf32, #tpu.memory_space<vmem>>, vector<1x18x8xf32>
    %6 = vector.shape_cast %5 : vector<1x18x8xf32> to vector<18x8xf32>
    %c0_8 = arith.constant 0 : index
    %c8 = arith.constant 8 : index
    %7 = vector.load %arg5[%c0_8, %c8] : memref<18x24xf32, #tpu.memory_space<vmem>>, vector<18x8xf32>
    tpu.vector_store %arg5[%c0_8, %c8], %6 {strides = array<i32>} : memref<18x24xf32, #tpu.memory_space<vmem>>, vector<18x8xf32>,
    %c0_9 = arith.constant 0 : index
    %c2_10 = arith.constant 2 : index
    %c0_11 = arith.constant 0 : index
    %8 = vector.load %arg1[%c0_9, %c2_10, %c0_11] : memref<1x18x8xf32, #tpu.memory_space<vmem>>, vector<1x16x8xf32>
    %9 = vector.shape_cast %8 : vector<1x16x8xf32> to vector<16x8xf32>
    %c0_12 = arith.constant 0 : index
    %c16 = arith.constant 16 : index
    %10 = vector.load %arg5[%c0_12, %c16] : memref<18x24xf32, #tpu.memory_space<vmem>>, vector<16x8xf32>
    tpu.vector_store %arg5[%c0_12, %c16], %9 {strides = array<i32>} : memref<18x24xf32, #tpu.memory_space<vmem>>, vector<16x8xf32>,
    %cst_13 = arith.constant 0.000000e+00 : f32
    %11 = vector.broadcast %cst_13 : f32 to vector<2x8xf32>
    %c16_14 = arith.constant 16 : index
    %c16_15 = arith.constant 16 : index
    %12 = vector.load %arg5[%c16_14, %c16_15] : memref<18x24xf32, #tpu.memory_space<vmem>>, vector<2x8xf32>
    tpu.vector_store %arg5[%c16_14, %c16_15], %11 {strides = array<i32>} : memref<18x24xf32, #tpu.memory_space<vmem>>, vector<2x8xf32>,
    %c0_16 = arith.constant 0 : index
    %c0_17 = arith.constant 0 : index
    %13 = vector.load %arg5[%c0_16, %c0_17] : memref<18x24xf32, #tpu.memory_space<vmem>>, vector<18x24xf32>
    %c0_18 = arith.constant 0 : index
    %c0_19 = arith.constant 0 : index
    %14 = vector.load %arg2[%c0_18, %c0_19] : memref<24x8xf32, #tpu.memory_space<vmem>>, vector<24x8xf32>
    %cst_20 = arith.constant dense<0.000000e+00> : vector<18x8xf32>
    %15 = tpu.matmul %13, %14, %cst_20 {dimension_numbers = #tpu.dot_dimension_numbers<[1], [0], [0], [1], [0, 0, 1, 1], [], []>} : vector<18x24xf32>, vector<24x8xf32>, vector<18x8xf32> -> vector<18x8xf32>
    %c0_21 = arith.constant 0 : index
    %c0_22 = arith.constant 0 : index
    %16 = vector.load %arg3[%c0_21, %c0_22] : memref<1x8xf32, #tpu.memory_space<vmem>>, vector<1x8xf32>
    %17 = vector.broadcast %16 : vector<1x8xf32> to vector<18x8xf32>
    %18 = arith.addf %15, %17 : vector<18x8xf32>
    %cst_23 = arith.constant dense<0.000000e+00> : vector<8xf32>
    %19 = vector.multi_reduction <add>, %18, %cst_23 [0] : vector<18x8xf32> to vector<8xf32>
    %20 = vector.shape_cast %19 : vector<8xf32> to vector<1x8xf32>
    %cst_24 = arith.constant 0.055555556 : f32
    %21 = vector.broadcast %cst_24 : f32 to vector<1x8xf32>
    %22 = arith.mulf %20, %21 : vector<1x8xf32>
    %23 = vector.broadcast %22 : vector<1x8xf32> to vector<18x8xf32>
    %24 = arith.subf %18, %23 : vector<18x8xf32>
    %25 = arith.mulf %24, %24 : vector<18x8xf32>
    %cst_25 = arith.constant dense<0.000000e+00> : vector<8xf32>
    %26 = vector.multi_reduction <add>, %25, %cst_25 [0] : vector<18x8xf32> to vector<8xf32>
    %27 = vector.shape_cast %26 : vector<8xf32> to vector<1x8xf32>
    %c0_26 = arith.constant 0 : index
    %c0_27 = arith.constant 0 : index
    %c0_28 = arith.constant 0 : index
    %28 = vector.load %arg4[%c0_26, %c0_27, %c0_28] : memref<1x2x8xf32, #tpu.memory_space<vmem>>, vector<1x1x8xf32>
    %29 = vector.shape_cast %28 : vector<1x1x8xf32> to vector<1x8xf32>
    %30 = vector.shape_cast %20 : vector<1x8xf32> to vector<1x1x8xf32>
    tpu.vector_store %arg4[%c0_26, %c0_27, %c0_28], %30 {strides = array<i32>} : memref<1x2x8xf32, #tpu.memory_space<vmem>>, vector<1x1x8xf32>,
    %c0_29 = arith.constant 0 : index
    %c1 = arith.constant 1 : index
    %c0_30 = arith.constant 0 : index
    %31 = vector.load %arg4[%c0_29, %c1, %c0_30] : memref<1x2x8xf32, #tpu.memory_space<vmem>>, vector<1x1x8xf32>
    %32 = vector.shape_cast %31 : vector<1x1x8xf32> to vector<1x8xf32>
    %33 = vector.shape_cast %27 : vector<1x8xf32> to vector<1x1x8xf32>
    tpu.vector_store %arg4[%c0_29, %c1, %c0_30], %33 {strides = array<i32>} : memref<1x2x8xf32, #tpu.memory_space<vmem>>, vector<1x1x8xf32>,
    return
  }
  func.func @transform_0(%arg0: i32) -> (i32, i32, i32) {
    %c0_i32 = arith.constant 0 : i32
    %c0_i32_0 = arith.constant 0 : i32
    %c0_i32_1 = arith.constant 0 : i32
    return %arg0, %c0_i32, %c0_i32_0 : i32, i32, i32
  }
  func.func @transform_1(%arg0: i32) -> (i32, i32) {
    %c0_i32 = arith.constant 0 : i32
    %c0_i32_0 = arith.constant 0 : i32
    %c0_i32_1 = arith.constant 0 : i32
    return %c0_i32, %c0_i32_0 : i32, i32
  }
  func.func @transform_2(%arg0: i32) -> (i32, i32) {
    %c0_i32 = arith.constant 0 : i32
    %c0_i32_0 = arith.constant 0 : i32
    %c0_i32_1 = arith.constant 0 : i32
    return %c0_i32, %c0_i32_0 : i32, i32
  }
  func.func @transform_3(%arg0: i32) -> (i32, i32, i32) {
    %c0_i32 = arith.constant 0 : i32
    %c0_i32_0 = arith.constant 0 : i32
    %c0_i32_1 = arith.constant 0 : i32
    return %arg0, %c0_i32, %c0_i32_0 : i32, i32, i32
  }
}

module attributes {stable_mosaic.version = 11 : i64} {
  func.func @_apply_kernel(%arg0: i32, %arg1: memref<1x18x8xf32, #tpu.memory_space<vmem>>, %arg2: memref<24x8xf32, #tpu.memory_space<vmem>>, %arg3: memref<1x8xf32, #tpu.memory_space<vmem>>, %arg4: memref<1x8xf32, #tpu.memory_space<vmem>>, %arg5: memref<1x8xf32, #tpu.memory_space<vmem>>, %arg6: memref<1x18x8xf32, #tpu.memory_space<vmem>>, %arg7: memref<18x24xf32, #tpu.memory_space<vmem>>) attributes {dimension_semantics = [#tpu.dimension_semantics<parallel>], iteration_bounds = array<i64: 2>, scalar_prefetch = 0 : i64, scratch_operands = 1 : i64, tpu.core_type = #tpu.core_type<tc>, window_params = [{transform_indices = @transform_0, window_bounds = array<i64: 1, 18, 8>}, {pipeline_mode = #tpu.pipeline_mode<synchronous>, transform_indices = @transform_1, window_bounds = array<i64: 24, 8>}, {pipeline_mode = #tpu.pipeline_mode<synchronous>, transform_indices = @transform_2, window_bounds = array<i64: 1, 8>}, {pipeline_mode = #tpu.pipeline_mode<synchronous>, transform_indices = @transform_3, window_bounds = array<i64: 1, 8>}, {pipeline_mode = #tpu.pipeline_mode<synchronous>, transform_indices = @transform_4, window_bounds = array<i64: 1, 8>}, {transform_indices = @transform_5, window_bounds = array<i64: 1, 18, 8>}]} {
    %cst = arith.constant 0.000000e+00 : f32
    %0 = vector.broadcast %cst : f32 to vector<2x8xf32>
    %c0 = arith.constant 0 : index
    %c0_0 = arith.constant 0 : index
    %1 = vector.load %arg7[%c0, %c0_0] : memref<18x24xf32, #tpu.memory_space<vmem>>, vector<2x8xf32>
    tpu.vector_store %arg7[%c0, %c0_0], %0 {strides = array<i32>} : memref<18x24xf32, #tpu.memory_space<vmem>>, vector<2x8xf32>,
    %c0_1 = arith.constant 0 : index
    %c0_2 = arith.constant 0 : index
    %c0_3 = arith.constant 0 : index
    %2 = vector.load %arg1[%c0_1, %c0_2, %c0_3] : memref<1x18x8xf32, #tpu.memory_space<vmem>>, vector<1x16x8xf32>
    %3 = vector.shape_cast %2 : vector<1x16x8xf32> to vector<16x8xf32>
    %c2 = arith.constant 2 : index
    %c0_4 = arith.constant 0 : index
    %4 = vector.load %arg7[%c2, %c0_4] : memref<18x24xf32, #tpu.memory_space<vmem>>, vector<16x8xf32>
    tpu.vector_store %arg7[%c2, %c0_4], %3 {strides = array<i32>} : memref<18x24xf32, #tpu.memory_space<vmem>>, vector<16x8xf32>,
    %c0_5 = arith.constant 0 : index
    %c0_6 = arith.constant 0 : index
    %c0_7 = arith.constant 0 : index
    %5 = vector.load %arg1[%c0_5, %c0_6, %c0_7] : memref<1x18x8xf32, #tpu.memory_space<vmem>>, vector<1x18x8xf32>
    %6 = vector.shape_cast %5 : vector<1x18x8xf32> to vector<18x8xf32>
    %c0_8 = arith.constant 0 : index
    %c8 = arith.constant 8 : index
    %7 = vector.load %arg7[%c0_8, %c8] : memref<18x24xf32, #tpu.memory_space<vmem>>, vector<18x8xf32>
    tpu.vector_store %arg7[%c0_8, %c8], %6 {strides = array<i32>} : memref<18x24xf32, #tpu.memory_space<vmem>>, vector<18x8xf32>,
    %c0_9 = arith.constant 0 : index
    %c2_10 = arith.constant 2 : index
    %c0_11 = arith.constant 0 : index
    %8 = vector.load %arg1[%c0_9, %c2_10, %c0_11] : memref<1x18x8xf32, #tpu.memory_space<vmem>>, vector<1x16x8xf32>
    %9 = vector.shape_cast %8 : vector<1x16x8xf32> to vector<16x8xf32>
    %c0_12 = arith.constant 0 : index
    %c16 = arith.constant 16 : index
    %10 = vector.load %arg7[%c0_12, %c16] : memref<18x24xf32, #tpu.memory_space<vmem>>, vector<16x8xf32>
    tpu.vector_store %arg7[%c0_12, %c16], %9 {strides = array<i32>} : memref<18x24xf32, #tpu.memory_space<vmem>>, vector<16x8xf32>,
    %cst_13 = arith.constant 0.000000e+00 : f32
    %11 = vector.broadcast %cst_13 : f32 to vector<2x8xf32>
    %c16_14 = arith.constant 16 : index
    %c16_15 = arith.constant 16 : index
    %12 = vector.load %arg7[%c16_14, %c16_15] : memref<18x24xf32, #tpu.memory_space<vmem>>, vector<2x8xf32>
    tpu.vector_store %arg7[%c16_14, %c16_15], %11 {strides = array<i32>} : memref<18x24xf32, #tpu.memory_space<vmem>>, vector<2x8xf32>,
    %c0_16 = arith.constant 0 : index
    %c0_17 = arith.constant 0 : index
    %13 = vector.load %arg7[%c0_16, %c0_17] : memref<18x24xf32, #tpu.memory_space<vmem>>, vector<18x24xf32>
    %c0_18 = arith.constant 0 : index
    %c0_19 = arith.constant 0 : index
    %14 = vector.load %arg2[%c0_18, %c0_19] : memref<24x8xf32, #tpu.memory_space<vmem>>, vector<24x8xf32>
    %cst_20 = arith.constant dense<0.000000e+00> : vector<18x8xf32>
    %15 = tpu.matmul %13, %14, %cst_20 {dimension_numbers = #tpu.dot_dimension_numbers<[1], [0], [0], [1], [0, 0, 1, 1], [], []>} : vector<18x24xf32>, vector<24x8xf32>, vector<18x8xf32> -> vector<18x8xf32>
    %c0_21 = arith.constant 0 : index
    %c0_22 = arith.constant 0 : index
    %16 = vector.load %arg3[%c0_21, %c0_22] : memref<1x8xf32, #tpu.memory_space<vmem>>, vector<1x8xf32>
    %17 = vector.broadcast %16 : vector<1x8xf32> to vector<18x8xf32>
    %18 = arith.addf %15, %17 : vector<18x8xf32>
    %c0_23 = arith.constant 0 : index
    %c0_24 = arith.constant 0 : index
    %19 = vector.load %arg4[%c0_23, %c0_24] : memref<1x8xf32, #tpu.memory_space<vmem>>, vector<1x8xf32>
    %20 = vector.broadcast %19 : vector<1x8xf32> to vector<18x8xf32>
    %21 = arith.mulf %18, %20 : vector<18x8xf32>
    %c0_25 = arith.constant 0 : index
    %c0_26 = arith.constant 0 : index
    %22 = vector.load %arg5[%c0_25, %c0_26] : memref<1x8xf32, #tpu.memory_space<vmem>>, vector<1x8xf32>
    %23 = vector.broadcast %22 : vector<1x8xf32> to vector<18x8xf32>
    %24 = arith.addf %21, %23 : vector<18x8xf32>
    %c0_27 = arith.constant 0 : index
    %c0_28 = arith.constant 0 : index
    %c0_29 = arith.constant 0 : index
    %25 = vector.load %arg6[%c0_27, %c0_28, %c0_29] : memref<1x18x8xf32, #tpu.memory_space<vmem>>, vector<1x18x8xf32>
    %26 = vector.shape_cast %25 : vector<1x18x8xf32> to vector<18x8xf32>
    %27 = vector.shape_cast %24 : vector<18x8xf32> to vector<1x18x8xf32>
    tpu.vector_store %arg6[%c0_27, %c0_28, %c0_29], %27 {strides = array<i32>} : memref<1x18x8xf32, #tpu.memory_space<vmem>>, vector<1x18x8xf32>,
    return
  }
  func.func @transform_0(%arg0: i32) -> (i32, i32, i32) {
    %c0_i32 = arith.constant 0 : i32
    %c0_i32_0 = arith.constant 0 : i32
    %c0_i32_1 = arith.constant 0 : i32
    return %arg0, %c0_i32, %c0_i32_0 : i32, i32, i32
  }
  func.func @transform_1(%arg0: i32) -> (i32, i32) {
    %c0_i32 = arith.constant 0 : i32
    %c0_i32_0 = arith.constant 0 : i32
    %c0_i32_1 = arith.constant 0 : i32
    return %c0_i32, %c0_i32_0 : i32, i32
  }
  func.func @transform_2(%arg0: i32) -> (i32, i32) {
    %c0_i32 = arith.constant 0 : i32
    %c0_i32_0 = arith.constant 0 : i32
    %c0_i32_1 = arith.constant 0 : i32
    return %c0_i32, %c0_i32_0 : i32, i32
  }
  func.func @transform_3(%arg0: i32) -> (i32, i32) {
    %c0_i32 = arith.constant 0 : i32
    %c0_i32_0 = arith.constant 0 : i32
    %c0_i32_1 = arith.constant 0 : i32
    return %c0_i32, %c0_i32_0 : i32, i32
  }
  func.func @transform_4(%arg0: i32) -> (i32, i32) {
    %c0_i32 = arith.constant 0 : i32
    %c0_i32_0 = arith.constant 0 : i32
    %c0_i32_1 = arith.constant 0 : i32
    return %c0_i32, %c0_i32_0 : i32, i32
  }
  func.func @transform_5(%arg0: i32) -> (i32, i32, i32) {
    %c0_i32 = arith.constant 0 : i32
    %c0_i32_0 = arith.constant 0 : i32
    %c0_i32_1 = arith.constant 0 : i32
    return %arg0, %c0_i32, %c0_i32_0 : i32, i32, i32
  }
}

</mosaic_0001>

<llo_original>
// kernel: dilconv1d_forward.2
$region0: #{dilconv1d_forward.2}
  #allocation0 [shape = 'u32[]', space=smem, size = 0x4, offset = 0x4, fixed_abs, tag = 'smem constant byte address 0x4 - core index']
  #allocation1 [shape = 'u32[72,128]{1,0:T(1,128)}', space=vmem, size = 0x9000, scoped, tag = 'internal scratch']
  #allocation2 [shape = 'f32[18,24]{1,0:T(8,128)}', space=vmem, size = 0x3000, scoped, tag = 'scratch operand']
  %s0 = inlined_call_operand.vmem [shape: f32[2,18,8], index: 0, kind: input, shape index: {}]
  %s1 = inlined_call_operand.vmem [shape: f32[24,8], index: 1, kind: input, shape index: {}]
  %s2 = inlined_call_operand.vmem [shape: f32[1,8], index: 2, kind: input, shape index: {}]
  %s3 = inlined_call_operand.vmem [shape: f32[2,2,8], index: 3, kind: output, shape index: {}]
  %s4 = sld [smem:[#allocation0]]
  $region45: #{dilconv1d_forward.2} parent=0
    _
  %s6 = ssub.s32 1, %s4
  %s7 = scalar_select 0, %s6, %s4
  loop: start=0, step=1, limit=4
  $region2: #{dilconv1d_forward.2} parent=0 // loop_pre_header
    _
  $region3: #{dilconv1d_forward.2} parent=0 // loop_header
    %s9 = sphi 0, %s13
    %p10 = scmp.ge.s32.totalorder %s9, 4
    %s19 = sphi 0, %s21
    %s22 = sphi 0, %s19
    %s23 = sphi 0, %s22
    %s39 = sphi 0, %s23
    %s43 = sphi 0, %s43
    %s45 = sphi 0, %s43
    %s46 = sphi 0, %s45
    %s60 = sphi 0, %s46
    %s64 = sphi 0, %s64
    %s66 = sphi 0, %s64
    %s67 = sphi 0, %s66
    %s81 = sphi 0, %s67
    %s87 = sphi 0, %s89
    %s90 = sphi 0, %s87
    %s91 = sphi 0, %s90
    %s107 = sphi 0, %s91
  $region4: #{dilconv1d_forward.2} parent=0 // loop_header_branch
    %12 = sbr.rel (%p10) target = $region8
  $region5: #{dilconv1d_forward.2} parent=0 // loop_body
    %s14 = ssub.s32 %s9, 1
    %s15 = ssub.s32 %s9, 2
    %s16 = sadd.s32 %s9, 1
    %s17 = ssub.s32 %s9, %s16
    %p18 = scmp.eq.s32.totalorder %s17, 0
    %s20 = sadd.s32 %s19, 1
    %s21 = scalar_select %p18, %s19, %s20
    %p24 = pneg %p18
    %p25 = scmp.eq.s32.totalorder %s9, 1
    %p26 = por %p24, %p25
    %p27 = scmp.ne.s32.totalorder %s19, %s22
    %p28 = scmp.eq.s32.totalorder %s9, 0
    %p29 = por %p27, %p28
    %p30 = scmp.ne.s32.totalorder %s19, %s22
    %p31 = scmp.eq.s32.totalorder %s14, 1
    %p32 = por %p30, %p31
    %p33 = scmp.ne.s32.totalorder %s22, %s23
    %p34 = scmp.eq.s32.totalorder %s14, 0
    %p35 = por %p33, %p34
    %p36 = scmp.ne.s32.totalorder %s22, %s23
    %p37 = scmp.eq.s32.totalorder %s15, 1
    %p38 = por %p36, %p37
    %p40 = scmp.ne.s32.totalorder %s23, %s39
    %p41 = scmp.eq.s32.totalorder %s15, 0
    %p42 = por %p40, %p41
    %s44 = sadd.s32 %s43, 1
    %p47 = scmp.eq.s32.totalorder %s9, 1
    %p48 = scmp.ne.s32.totalorder %s43, %s45
    %p49 = scmp.eq.s32.totalorder %s9, 0
    %p50 = por %p48, %p49
    %p51 = scmp.ne.s32.totalorder %s43, %s45
    %p52 = scmp.eq.s32.totalorder %s14, 1
    %p53 = por %p51, %p52
    %p54 = scmp.ne.s32.totalorder %s45, %s46
    %p55 = scmp.eq.s32.totalorder %s14, 0
    %p56 = por %p54, %p55
    %p57 = scmp.ne.s32.totalorder %s45, %s46
    %p58 = scmp.eq.s32.totalorder %s15, 1
    %p59 = por %p57, %p58
    %p61 = scmp.ne.s32.totalorder %s46, %s60
    %p62 = scmp.eq.s32.totalorder %s15, 0
    %p63 = por %p61, %p62
    %s65 = sadd.s32 %s64, 1
    %p68 = scmp.eq.s32.totalorder %s9, 1
    %p69 = scmp.ne.s32.totalorder %s64, %s66
    %p70 = scmp.eq.s32.totalorder %s9, 0
    %p71 = por %p69, %p70
    %p72 = scmp.ne.s32.totalorder %s64, %s66
    %p73 = scmp.eq.s32.totalorder %s14, 1
    %p74 = por %p72, %p73
    %p75 = scmp.ne.s32.totalorder %s66, %s67
    %p76 = scmp.eq.s32.totalorder %s14, 0
    %p77 = por %p75, %p76
    %p78 = scmp.ne.s32.totalorder %s66, %s67
    %p79 = scmp.eq.s32.totalorder %s15, 1
    %p80 = por %p78, %p79
    %p82 = scmp.ne.s32.totalorder %s67, %s81
    %p83 = scmp.eq.s32.totalorder %s15, 0
    %p84 = por %p82, %p83
    %s85 = ssub.s32 %s9, %s16
    %p86 = scmp.eq.s32.totalorder %s85, 0
    %s88 = sadd.s32 %s87, 1
    %s89 = scalar_select %p86, %s87, %s88
    %p92 = pneg %p86
    %p93 = scmp.eq.s32.totalorder %s9, 1
    %p94 = por %p92, %p93
    %p95 = scmp.ne.s32.totalorder %s87, %s90
    %p96 = scmp.eq.s32.totalorder %s9, 0
    %p97 = por %p95, %p96
    %p98 = scmp.ne.s32.totalorder %s87, %s90
    %p99 = scmp.eq.s32.totalorder %s14, 1
    %p100 = por %p98, %p99
    %p101 = scmp.ne.s32.totalorder %s90, %s91
    %p102 = scmp.eq.s32.totalorder %s14, 0
    %p103 = por %p101, %p102
    %p104 = scmp.ne.s32.totalorder %s90, %s91
    %p105 = scmp.eq.s32.totalorder %s15, 1
    %p106 = por %p104, %p105
    %p108 = scmp.ne.s32.totalorder %s91, %s107
    %p109 = scmp.eq.s32.totalorder %s15, 0
    %p110 = por %p108, %p109
    %p111 = scmp.le.s32.totalorder 1, %s9
    %p112 = scmp.lt.s32.totalorder %s9, 3
    %p113 = pnand %p111, %p112
    %p114 = pneg %p113
    // Predicated region
    $region9: #{dilconv1d_forward.2} parent=5 // pred_check
      _
    $region10: #{dilconv1d_forward.2} parent=5 // pred_check_branch
      %116 = sbr.rel (%p113) target = $region12
    $region11: #{dilconv1d_forward.2} parent=5 // pred_region
      %s117 = ssub.s32 %s9, 1
      // Predicated region
      $region13: #{dilconv1d_forward.2} parent=11 // pred_check
        %p118 = pneg %p56
      $region14: #{dilconv1d_forward.2} parent=11 // pred_check_branch
        %120 = sbr.rel (%p118) target = $region16
      $region15: #{dilconv1d_forward.2} parent=11 // pred_region
        _
      $region16: #{dilconv1d_forward.2} parent=11 // pred_fallthru
        _
      // Predicated region
      $region17: #{dilconv1d_forward.2} parent=11 // pred_check
        %p121 = pneg %p77
      $region18: #{dilconv1d_forward.2} parent=11 // pred_check_branch
        %123 = sbr.rel (%p121) target = $region20
      $region19: #{dilconv1d_forward.2} parent=11 // pred_region
        _
      $region20: #{dilconv1d_forward.2} parent=11 // pred_fallthru
        _
    $region12: #{dilconv1d_forward.2} parent=5 // pred_fallthru
      _
    %p124 = scmp.lt.s32.totalorder %s9, 2
    // Predicated region
    $region21: #{dilconv1d_forward.2} parent=5 // pred_check
      %p125 = pneg %p124
    $region22: #{dilconv1d_forward.2} parent=5 // pred_check_branch
      %127 = sbr.rel (%p125) target = $region24
    $region23: #{dilconv1d_forward.2} parent=5 // pred_region
      // Predicated region
      $region25: #{dilconv1d_forward.2} parent=23 // pred_check
        %p128 = pneg %p29
      $region26: #{dilconv1d_forward.2} parent=23 // pred_check_branch
        %130 = sbr.rel (%p128) target = $region28
      $region27: #{dilconv1d_forward.2} parent=23 // pred_region
        %p131 = scmp.lt.s32.totalorder %s9, 1
        %s132 = scalar_select %p131, %s9, 1
        %s133 = smul.addr %s132, 3
        %s134 = smul.addr %s133, 8
        %s135 = scalar_lea.vmem %s0, %s134
      $region28: #{dilconv1d_forward.2} parent=23 // pred_fallthru
        _
    $region24: #{dilconv1d_forward.2} parent=5 // pred_fallthru
      _
    %p136 = scmp.le.s32.totalorder 1, %s9
    %p137 = scmp.lt.s32.totalorder %s9, 3
    %p138 = pnand %p136, %p137
    %p139 = pneg %p138
    // Predicated region
    $region29: #{dilconv1d_forward.2} parent=5 // pred_check
      _
    $region30: #{dilconv1d_forward.2} parent=5 // pred_check_branch
      %141 = sbr.rel (%p138) target = $region32
    $region31: #{dilconv1d_forward.2} parent=5 // pred_region
      %s142 = ssub.s32 %s9, 1
      %p143 = scmp.lt.s32.totalorder %s14, 1
      %s144 = scalar_select %p143, %s14, 1
      %s145 = smul.addr %s144, 3
      %s146 = smul.addr %s145, 8
      %s147 = scalar_lea.vmem %s0, %s146
      %p148 = pneg %p35
      %p149 = pneg %p32
      %p150 = pneg %p56
      %p151 = pneg %p53
      %p152 = pneg %p77
      %p153 = pneg %p74
      %p154 = pneg %p103
      %p155 = pneg %p100
      %p156 = scmp.lt.s32.totalorder %s14, 1
      %s157 = scalar_select %p156, %s14, 1
      %s158 = smul.addr %s157, 2
      %s159 = scalar_lea.vmem %s3, %s158
      %p160 = scmp.lt.s32.totalorder %s14, 1
      %s161 = scalar_select %p160, %s14, 1
      %s162 = smul.addr %s161, 3
      %s163 = smul.addr %s162, 8
      %s164 = scalar_lea.vmem %s0, %s163
      %p165 = scmp.lt.s32.totalorder %s14, 1
      %s166 = scalar_select %p165, %s14, 1
      %s167 = smul.addr %s166, 2
      %s168 = scalar_lea.vmem %s3, %s167
      %vm169 = vcmask 58368
      %170 = vst.msk [vmem:[#allocation2] sm:$0x3] %vm169, 0.0
      %v171 = vld [vmem:[%s164] sm:$0xff]
      %v172 = vld [vmem:[%s164 + $0x8] sm:$0xff]
      %vm173 = vcmask 64512
      %174 = vst.msk [vmem:[#allocation2 + $0x2] sm:$0xff] %vm173, %v171
      %175 = vst.msk [vmem:[#allocation2 + $0xa] sm:$0xff] %vm173, %v172
      %v176 = vld [vmem:[%s164] sm:$0xff]
      %v177 = vld [vmem:[%s164 + $0x8] sm:$0xff]
      %v178 = vld [vmem:[%s164 + $0x10] sm:$0x3]
      %182 = vrot.lane.b32.xlu0 %v176, 8
      %v183 = vpop.permute.xlu0 %182
      %184 = vrot.lane.b32.xlu0 %v177, 8
      %v185 = vpop.permute.xlu0 %184
      %186 = vrot.lane.b32.xlu0 %v178, 8
      %v187 = vpop.permute.xlu0 %186
      %vm191 = vcmask 130112
      %192 = vst.msk [vmem:[#allocation2] sm:$0xff] %vm191, %v183
      %193 = vst.msk [vmem:[#allocation2 + $0x8] sm:$0xff] %vm191, %v185
      %vm194 = vcmask 123968
      %195 = vst.msk [vmem:[#allocation2 + $0x10] sm:$0x3] %vm194, %v187
      %v196 = vld [vmem:[%s164 + $0x2] sm:$0xff]
      %v197 = vld [vmem:[%s164 + $0xa] sm:$0xff]
      %200 = vrot.lane.b32.xlu0 %v196, 16
      %v201 = vpop.permute.xlu0 %200
      %202 = vrot.lane.b32.xlu0 %v197, 16
      %v203 = vpop.permute.xlu0 %202
      %vm206 = vcmask 195712
      %207 = vst.msk [vmem:[#allocation2] sm:$0xff] %vm206, %v201
      %208 = vst.msk [vmem:[#allocation2 + $0x8] sm:$0xff] %vm206, %v203
      %vm209 = vcmask 189568
      %210 = vst.msk [vmem:[#allocation2 + $0x10] sm:$0x3] %vm209, 0.0
      %v211 = vld [vmem:[#allocation2] sm:$0xff]
      %v212 = vld [vmem:[#allocation2 + $0x8] sm:$0xff]
      %v213 = vld [vmem:[#allocation2 + $0x10] sm:$0x3]
      %v214 = vld [vmem:[%s1] sm:$0xff]
      %v215 = vld [vmem:[%s1 + $0x8] sm:$0xff]
      %v216 = vld [vmem:[%s1 + $0x10] sm:$0xff]
      %v217 = vld [vmem:[%s2] sm:$0x1]
      %v219 = vperm.slane %v217, 0
      %vm221 = vcmask 195584
      %v223 = vsel %vm221, %v211, 0
      %v226 = vsel %vm221, %v212, 0
      %v229 = vsel %vm221, %v213, 0
      %231 = vmatpush.msra.mxu0 0.0
      %232 = vmatpush.msra.mxu0 0.0
      %233 = vmatpush.msra.mxu0 0.0
      %234 = vmatpush.msra.mxu0 0.0
      %235 = vmatpush.msra.mxu0 0.0
      %236 = vmatpush.msra.mxu0 0.0
      %237 = vmatpush.msra.mxu0 0.0
      %238 = vmatpush.msra.mxu0 0.0
      %239 = vmatpush.msra.mxu0 0.0
      %240 = vmatpush.msra.mxu0 0.0
      %241 = vmatpush.msra.mxu0 0.0
      %242 = vmatpush.msra.mxu0 0.0
      %243 = vmatpush.msra.mxu0 0.0
      %244 = vmatpush.msra.mxu0 %v216
      %245 = vmatpush.msra.mxu0 %v215
      %246 = vmatpush.msra.mxu0 %v214
      %247 = vmatmul.f32.gmra.mxu0 %v223
      %v248 = vpop.f32.mrf.mxu0
      %v249 = vadd.f32 %v219, %v248
      %250 = vmatmul.f32.gmra.mxu0 %v226
      %v251 = vpop.f32.mrf.mxu0
      %v252 = vadd.f32 %v219, %v251
      %253 = vmatmul.f32.gmra.mxu0 %v229
      %v254 = vpop.f32.mrf.mxu0
      %v255 = vadd.f32 %v219, %v254
      %256 = vdwg.mxu0
      %v257 = vsel %vm173, %v249, 0.0
      %v258 = vsel %vm173, %v252, 0.0
      %v259 = vadd.f32 %v257, %v258
      %v260 = vsel %vm169, %v255, 0.0
      %v261 = vadd.f32 %v259, %v260
      %v262 = vrot.slane %v261, 4
      %v263 = vadd.f32 %v261, %v262
      %v264 = vrot.slane %v263, 2
      %v265 = vadd.f32 %v263, %v264
      %v266 = vrot.slane %v265, 1
      %v267 = vadd.f32 %v265, %v266
      %v268 = vmul.f32 %v267, 0.055555556
      %v269 = vsub.f32 %v249, %v268
      %v270 = vsub.f32 %v252, %v268
      %v271 = vsub.f32 %v255, %v268
      %v272 = vmul.f32 %v269, %v269
      %v273 = vmul.f32 %v270, %v270
      %v274 = vmul.f32 %v271, %v271
      %v275 = vsel %vm173, %v272, 0.0
      %v276 = vsel %vm173, %v273, 0.0
      %v277 = vadd.f32 %v275, %v276
      %v278 = vsel %vm169, %v274, 0.0
      %v279 = vadd.f32 %v277, %v278
      %v280 = vrot.slane %v279, 4
      %v281 = vadd.f32 %v279, %v280
      %v282 = vrot.slane %v281, 2
      %v283 = vadd.f32 %v281, %v282
      %v284 = vrot.slane %v283, 1
      %v285 = vadd.f32 %v283, %v284
      %vm286 = vcmask 57344
      %287 = vst.msk [vmem:[%s168] sm:$0x1] %vm286, %v267
      %288 = vst.msk [vmem:[%s168 + $0x1] sm:$0x1] %vm286, %v285
      %p289 = scmp.lt.s32.totalorder %s14, 1
      %s290 = scalar_select %p289, %s14, 1
      %s291 = smul.addr %s290, 2
      %s292 = scalar_lea.vmem %s3, %s291
      // Predicated region
      $region33: #{dilconv1d_forward.2} parent=31 // pred_check
        %p293 = pneg %p100
      $region34: #{dilconv1d_forward.2} parent=31 // pred_check_branch
        %295 = sbr.rel (%p293) target = $region36
      $region35: #{dilconv1d_forward.2} parent=31 // pred_region
        _
      $region36: #{dilconv1d_forward.2} parent=31 // pred_fallthru
        _
    $region32: #{dilconv1d_forward.2} parent=5 // pred_fallthru
      _
    %p296 = scmp.le.s32.totalorder 2, %s9
    // Predicated region
    $region37: #{dilconv1d_forward.2} parent=5 // pred_check
      %p297 = pneg %p296
    $region38: #{dilconv1d_forward.2} parent=5 // pred_check_branch
      %299 = sbr.rel (%p297) target = $region40
    $region39: #{dilconv1d_forward.2} parent=5 // pred_region
      %s300 = ssub.s32 %s9, 2
      // Predicated region
      $region41: #{dilconv1d_forward.2} parent=39 // pred_check
        %p301 = pneg %p106
      $region42: #{dilconv1d_forward.2} parent=39 // pred_check_branch
        %303 = sbr.rel (%p301) target = $region44
      $region43: #{dilconv1d_forward.2} parent=39 // pred_region
        %p304 = scmp.lt.s32.totalorder %s15, 1
        %s305 = scalar_select %p304, %s15, 1
        %s306 = smul.addr %s305, 2
        %s307 = scalar_lea.vmem %s3, %s306
      $region44: #{dilconv1d_forward.2} parent=39 // pred_fallthru
        _
    $region40: #{dilconv1d_forward.2} parent=5 // pred_fallthru
      _
  $region6: #{dilconv1d_forward.2} parent=0 // loop_footer
    %s13 = sadd.s32 1, %s9
  $region7: #{dilconv1d_forward.2} parent=0 // loop_footer_branch
    %8 = sbr.rel target = $region3
  $region8: #{dilconv1d_forward.2} parent=0 // loop_exit
    _

// kernel: dilconv1d_forward.3
$region0: #{dilconv1d_forward.3}
  #allocation0 [shape = 'u32[]', space=smem, size = 0x4, offset = 0x4, fixed_abs, tag = 'smem constant byte address 0x4 - core index']
  #allocation1 [shape = 'u32[72,128]{1,0:T(1,128)}', space=vmem, size = 0x9000, scoped, tag = 'internal scratch']
  #allocation2 [shape = 'f32[18,24]{1,0:T(8,128)}', space=vmem, size = 0x3000, scoped, tag = 'scratch operand']
  %s0 = inlined_call_operand.vmem [shape: f32[2,18,8], index: 0, kind: input, shape index: {}]
  %s1 = inlined_call_operand.vmem [shape: f32[24,8], index: 1, kind: input, shape index: {}]
  %s2 = inlined_call_operand.vmem [shape: f32[1,8], index: 2, kind: input, shape index: {}]
  %s3 = inlined_call_operand.vmem [shape: f32[1,8], index: 3, kind: input, shape index: {}]
  %s4 = inlined_call_operand.vmem [shape: f32[1,8], index: 4, kind: input, shape index: {}]
  %s5 = inlined_call_operand.vmem [shape: f32[2,18,8], index: 5, kind: output, shape index: {}]
  %s6 = sld [smem:[#allocation0]]
  $region53: #{dilconv1d_forward.3} parent=0
    _
  %s8 = ssub.s32 1, %s6
  %s9 = scalar_select 0, %s8, %s6
  loop: start=0, step=1, limit=4
  $region2: #{dilconv1d_forward.3} parent=0 // loop_pre_header
    _
  $region3: #{dilconv1d_forward.3} parent=0 // loop_header
    %s11 = sphi 0, %s15
    %p12 = scmp.ge.s32.totalorder %s11, 4
    %s21 = sphi 0, %s23
    %s24 = sphi 0, %s21
    %s25 = sphi 0, %s24
    %s41 = sphi 0, %s25
    %s45 = sphi 0, %s45
    %s47 = sphi 0, %s45
    %s48 = sphi 0, %s47
    %s62 = sphi 0, %s48
    %s66 = sphi 0, %s66
    %s68 = sphi 0, %s66
    %s69 = sphi 0, %s68
    %s83 = sphi 0, %s69
    %s87 = sphi 0, %s87
    %s89 = sphi 0, %s87
    %s90 = sphi 0, %s89
    %s104 = sphi 0, %s90
    %s108 = sphi 0, %s108
    %s110 = sphi 0, %s108
    %s111 = sphi 0, %s110
    %s125 = sphi 0, %s111
    %s131 = sphi 0, %s133
    %s134 = sphi 0, %s131
    %s135 = sphi 0, %s134
    %s151 = sphi 0, %s135
  $region4: #{dilconv1d_forward.3} parent=0 // loop_header_branch
    %14 = sbr.rel (%p12) target = $region8
  $region5: #{dilconv1d_forward.3} parent=0 // loop_body
    %s16 = ssub.s32 %s11, 1
    %s17 = ssub.s32 %s11, 2
    %s18 = sadd.s32 %s11, 1
    %s19 = ssub.s32 %s11, %s18
    %p20 = scmp.eq.s32.totalorder %s19, 0
    %s22 = sadd.s32 %s21, 1
    %s23 = scalar_select %p20, %s21, %s22
    %p26 = pneg %p20
    %p27 = scmp.eq.s32.totalorder %s11, 1
    %p28 = por %p26, %p27
    %p29 = scmp.ne.s32.totalorder %s21, %s24
    %p30 = scmp.eq.s32.totalorder %s11, 0
    %p31 = por %p29, %p30
    %p32 = scmp.ne.s32.totalorder %s21, %s24
    %p33 = scmp.eq.s32.totalorder %s16, 1
    %p34 = por %p32, %p33
    %p35 = scmp.ne.s32.totalorder %s24, %s25
    %p36 = scmp.eq.s32.totalorder %s16, 0
    %p37 = por %p35, %p36
    %p38 = scmp.ne.s32.totalorder %s24, %s25
    %p39 = scmp.eq.s32.totalorder %s17, 1
    %p40 = por %p38, %p39
    %p42 = scmp.ne.s32.totalorder %s25, %s41
    %p43 = scmp.eq.s32.totalorder %s17, 0
    %p44 = por %p42, %p43
    %s46 = sadd.s32 %s45, 1
    %p49 = scmp.eq.s32.totalorder %s11, 1
    %p50 = scmp.ne.s32.totalorder %s45, %s47
    %p51 = scmp.eq.s32.totalorder %s11, 0
    %p52 = por %p50, %p51
    %p53 = scmp.ne.s32.totalorder %s45, %s47
    %p54 = scmp.eq.s32.totalorder %s16, 1
    %p55 = por %p53, %p54
    %p56 = scmp.ne.s32.totalorder %s47, %s48
    %p57 = scmp.eq.s32.totalorder %s16, 0
    %p58 = por %p56, %p57
    %p59 = scmp.ne.s32.totalorder %s47, %s48
    %p60 = scmp.eq.s32.totalorder %s17, 1
    %p61 = por %p59, %p60
    %p63 = scmp.ne.s32.totalorder %s48, %s62
    %p64 = scmp.eq.s32.totalorder %s17, 0
    %p65 = por %p63, %p64
    %s67 = sadd.s32 %s66, 1
    %p70 = scmp.eq.s32.totalorder %s11, 1
    %p71 = scmp.ne.s32.totalorder %s66, %s68
    %p72 = scmp.eq.s32.totalorder %s11, 0
    %p73 = por %p71, %p72
    %p74 = scmp.ne.s32.totalorder %s66, %s68
    %p75 = scmp.eq.s32.totalorder %s16, 1
    %p76 = por %p74, %p75
    %p77 = scmp.ne.s32.totalorder %s68, %s69
    %p78 = scmp.eq.s32.totalorder %s16, 0
    %p79 = por %p77, %p78
    %p80 = scmp.ne.s32.totalorder %s68, %s69
    %p81 = scmp.eq.s32.totalorder %s17, 1
    %p82 = por %p80, %p81
    %p84 = scmp.ne.s32.totalorder %s69, %s83
    %p85 = scmp.eq.s32.totalorder %s17, 0
    %p86 = por %p84, %p85
    %s88 = sadd.s32 %s87, 1
    %p91 = scmp.eq.s32.totalorder %s11, 1
    %p92 = scmp.ne.s32.totalorder %s87, %s89
    %p93 = scmp.eq.s32.totalorder %s11, 0
    %p94 = por %p92, %p93
    %p95 = scmp.ne.s32.totalorder %s87, %s89
    %p96 = scmp.eq.s32.totalorder %s16, 1
    %p97 = por %p95, %p96
    %p98 = scmp.ne.s32.totalorder %s89, %s90
    %p99 = scmp.eq.s32.totalorder %s16, 0
    %p100 = por %p98, %p99
    %p101 = scmp.ne.s32.totalorder %s89, %s90
    %p102 = scmp.eq.s32.totalorder %s17, 1
    %p103 = por %p101, %p102
    %p105 = scmp.ne.s32.totalorder %s90, %s104
    %p106 = scmp.eq.s32.totalorder %s17, 0
    %p107 = por %p105, %p106
    %s109 = sadd.s32 %s108, 1
    %p112 = scmp.eq.s32.totalorder %s11, 1
    %p113 = scmp.ne.s32.totalorder %s108, %s110
    %p114 = scmp.eq.s32.totalorder %s11, 0
    %p115 = por %p113, %p114
    %p116 = scmp.ne.s32.totalorder %s108, %s110
    %p117 = scmp.eq.s32.totalorder %s16, 1
    %p118 = por %p116, %p117
    %p119 = scmp.ne.s32.totalorder %s110, %s111
    %p120 = scmp.eq.s32.totalorder %s16, 0
    %p121 = por %p119, %p120
    %p122 = scmp.ne.s32.totalorder %s110, %s111
    %p123 = scmp.eq.s32.totalorder %s17, 1
    %p124 = por %p122, %p123
    %p126 = scmp.ne.s32.totalorder %s111, %s125
    %p127 = scmp.eq.s32.totalorder %s17, 0
    %p128 = por %p126, %p127
    %s129 = ssub.s32 %s11, %s18
    %p130 = scmp.eq.s32.totalorder %s129, 0
    %s132 = sadd.s32 %s131, 1
    %s133 = scalar_select %p130, %s131, %s132
    %p136 = pneg %p130
    %p137 = scmp.eq.s32.totalorder %s11, 1
    %p138 = por %p136, %p137
    %p139 = scmp.ne.s32.totalorder %s131, %s134
    %p140 = scmp.eq.s32.totalorder %s11, 0
    %p141 = por %p139, %p140
    %p142 = scmp.ne.s32.totalorder %s131, %s134
    %p143 = scmp.eq.s32.totalorder %s16, 1
    %p144 = por %p142, %p143
    %p145 = scmp.ne.s32.totalorder %s134, %s135
    %p146 = scmp.eq.s32.totalorder %s16, 0
    %p147 = por %p145, %p146
    %p148 = scmp.ne.s32.totalorder %s134, %s135
    %p149 = scmp.eq.s32.totalorder %s17, 1
    %p150 = por %p148, %p149
    %p152 = scmp.ne.s32.totalorder %s135, %s151
    %p153 = scmp.eq.s32.totalorder %s17, 0
    %p154 = por %p152, %p153
    %p155 = scmp.le.s32.totalorder 1, %s11
    %p156 = scmp.lt.s32.totalorder %s11, 3
    %p157 = pnand %p155, %p156
    %p158 = pneg %p157
    // Predicated region
    $region9: #{dilconv1d_forward.3} parent=5 // pred_check
      _
    $region10: #{dilconv1d_forward.3} parent=5 // pred_check_branch
      %160 = sbr.rel (%p157) target = $region12
    $region11: #{dilconv1d_forward.3} parent=5 // pred_region
      %s161 = ssub.s32 %s11, 1
      // Predicated region
      $region13: #{dilconv1d_forward.3} parent=11 // pred_check
        %p162 = pneg %p58
      $region14: #{dilconv1d_forward.3} parent=11 // pred_check_branch
        %164 = sbr.rel (%p162) target = $region16
      $region15: #{dilconv1d_forward.3} parent=11 // pred_region
        _
      $region16: #{dilconv1d_forward.3} parent=11 // pred_fallthru
        _
      // Predicated region
      $region17: #{dilconv1d_forward.3} parent=11 // pred_check
        %p165 = pneg %p79
      $region18: #{dilconv1d_forward.3} parent=11 // pred_check_branch
        %167 = sbr.rel (%p165) target = $region20
      $region19: #{dilconv1d_forward.3} parent=11 // pred_region
        _
      $region20: #{dilconv1d_forward.3} parent=11 // pred_fallthru
        _
      // Predicated region
      $region21: #{dilconv1d_forward.3} parent=11 // pred_check
        %p168 = pneg %p100
      $region22: #{dilconv1d_forward.3} parent=11 // pred_check_branch
        %170 = sbr.rel (%p168) target = $region24
      $region23: #{dilconv1d_forward.3} parent=11 // pred_region
        _
      $region24: #{dilconv1d_forward.3} parent=11 // pred_fallthru
        _
      // Predicated region
      $region25: #{dilconv1d_forward.3} parent=11 // pred_check
        %p171 = pneg %p121
      $region26: #{dilconv1d_forward.3} parent=11 // pred_check_branch
        %173 = sbr.rel (%p171) target = $region28
      $region27: #{dilconv1d_forward.3} parent=11 // pred_region
        _
      $region28: #{dilconv1d_forward.3} parent=11 // pred_fallthru
        _
    $region12: #{dilconv1d_forward.3} parent=5 // pred_fallthru
      _
    %p174 = scmp.lt.s32.totalorder %s11, 2
    // Predicated region
    $region29: #{dilconv1d_forward.3} parent=5 // pred_check
      %p175 = pneg %p174
    $region30: #{dilconv1d_forward.3} parent=5 // pred_check_branch
      %177 = sbr.rel (%p175) target = $region32
    $region31: #{dilconv1d_forward.3} parent=5 // pred_region
      // Predicated region
      $region33: #{dilconv1d_forward.3} parent=31 // pred_check
        %p178 = pneg %p31
      $region34: #{dilconv1d_forward.3} parent=31 // pred_check_branch
        %180 = sbr.rel (%p178) target = $region36
      $region35: #{dilconv1d_forward.3} parent=31 // pred_region
        %p181 = scmp.lt.s32.totalorder %s11, 1
        %s182 = scalar_select %p181, %s11, 1
        %s183 = smul.addr %s182, 3
        %s184 = smul.addr %s183, 8
        %s185 = scalar_lea.vmem %s0, %s184
      $region36: #{dilconv1d_forward.3} parent=31 // pred_fallthru
        _
    $region32: #{dilconv1d_forward.3} parent=5 // pred_fallthru
      _
    %p186 = scmp.le.s32.totalorder 1, %s11
    %p187 = scmp.lt.s32.totalorder %s11, 3
    %p188 = pnand %p186, %p187
    %p189 = pneg %p188
    // Predicated region
    $region37: #{dilconv1d_forward.3} parent=5 // pred_check
      _
    $region38: #{dilconv1d_forward.3} parent=5 // pred_check_branch
      %191 = sbr.rel (%p188) target = $region40
    $region39: #{dilconv1d_forward.3} parent=5 // pred_region
      %s192 = ssub.s32 %s11, 1
      %p193 = scmp.lt.s32.totalorder %s16, 1
      %s194 = scalar_select %p193, %s16, 1
      %s195 = smul.addr %s194, 3
      %s196 = smul.addr %s195, 8
      %s197 = scalar_lea.vmem %s0, %s196
      %p198 = pneg %p37
      %p199 = pneg %p34
      %p200 = pneg %p58
      %p201 = pneg %p55
      %p202 = pneg %p79
      %p203 = pneg %p76
      %p204 = pneg %p100
      %p205 = pneg %p97
      %p206 = pneg %p121
      %p207 = pneg %p118
      %p208 = pneg %p147
      %p209 = pneg %p144
      %p210 = scmp.lt.s32.totalorder %s16, 1
      %s211 = scalar_select %p210, %s16, 1
      %s212 = smul.addr %s211, 3
      %s213 = smul.addr %s212, 8
      %s214 = scalar_lea.vmem %s5, %s213
      %p215 = scmp.lt.s32.totalorder %s16, 1
      %s216 = scalar_select %p215, %s16, 1
      %s217 = smul.addr %s216, 3
      %s218 = smul.addr %s217, 8
      %s219 = scalar_lea.vmem %s0, %s218
      %p220 = scmp.lt.s32.totalorder %s16, 1
      %s221 = scalar_select %p220, %s16, 1
      %s222 = smul.addr %s221, 3
      %s223 = smul.addr %s222, 8
      %s224 = scalar_lea.vmem %s5, %s223
      %vm225 = vcmask 58368
      %226 = vst.msk [vmem:[#allocation2] sm:$0x3] %vm225, 0.0
      %v227 = vld [vmem:[%s219] sm:$0xff]
      %v228 = vld [vmem:[%s219 + $0x8] sm:$0xff]
      %vm229 = vcmask 64512
      %230 = vst.msk [vmem:[#allocation2 + $0x2] sm:$0xff] %vm229, %v227
      %231 = vst.msk [vmem:[#allocation2 + $0xa] sm:$0xff] %vm229, %v228
      %v232 = vld [vmem:[%s219] sm:$0xff]
      %v233 = vld [vmem:[%s219 + $0x8] sm:$0xff]
      %v234 = vld [vmem:[%s219 + $0x10] sm:$0x3]
      %238 = vrot.lane.b32.xlu0 %v232, 8
      %v239 = vpop.permute.xlu0 %238
      %240 = vrot.lane.b32.xlu0 %v233, 8
      %v241 = vpop.permute.xlu0 %240
      %242 = vrot.lane.b32.xlu0 %v234, 8
      %v243 = vpop.permute.xlu0 %242
      %vm247 = vcmask 130112
      %248 = vst.msk [vmem:[#allocation2] sm:$0xff] %vm247, %v239
      %249 = vst.msk [vmem:[#allocation2 + $0x8] sm:$0xff] %vm247, %v241
      %vm250 = vcmask 123968
      %251 = vst.msk [vmem:[#allocation2 + $0x10] sm:$0x3] %vm250, %v243
      %v252 = vld [vmem:[%s219 + $0x2] sm:$0xff]
      %v253 = vld [vmem:[%s219 + $0xa] sm:$0xff]
      %256 = vrot.lane.b32.xlu0 %v252, 16
      %v257 = vpop.permute.xlu0 %256
      %258 = vrot.lane.b32.xlu0 %v253, 16
      %v259 = vpop.permute.xlu0 %258
      %vm262 = vcmask 195712
      %263 = vst.msk [vmem:[#allocation2] sm:$0xff] %vm262, %v257
      %264 = vst.msk [vmem:[#allocation2 + $0x8] sm:$0xff] %vm262, %v259
      %vm265 = vcmask 189568
      %266 = vst.msk [vmem:[#allocation2 + $0x10] sm:$0x3] %vm265, 0.0
      %v267 = vld [vmem:[#allocation2] sm:$0xff]
      %v268 = vld [vmem:[#allocation2 + $0x8] sm:$0xff]
      %v269 = vld [vmem:[#allocation2 + $0x10] sm:$0x3]
      %v270 = vld [vmem:[%s1] sm:$0xff]
      %v271 = vld [vmem:[%s1 + $0x8] sm:$0xff]
      %v272 = vld [vmem:[%s1 + $0x10] sm:$0xff]
      %v273 = vld [vmem:[%s2] sm:$0x1]
      %v275 = vperm.slane %v273, 0
      %vm277 = vcmask 195584
      %v279 = vsel %vm277, %v267, 0
      %v282 = vsel %vm277, %v268, 0
      %v285 = vsel %vm277, %v269, 0
      %287 = vmatpush.msra.mxu0 0.0
      %288 = vmatpush.msra.mxu0 0.0
      %289 = vmatpush.msra.mxu0 0.0
      %290 = vmatpush.msra.mxu0 0.0
      %291 = vmatpush.msra.mxu0 0.0
      %292 = vmatpush.msra.mxu0 0.0
      %293 = vmatpush.msra.mxu0 0.0
      %294 = vmatpush.msra.mxu0 0.0
      %295 = vmatpush.msra.mxu0 0.0
      %296 = vmatpush.msra.mxu0 0.0
      %297 = vmatpush.msra.mxu0 0.0
      %298 = vmatpush.msra.mxu0 0.0
      %299 = vmatpush.msra.mxu0 0.0
      %300 = vmatpush.msra.mxu0 %v272
      %301 = vmatpush.msra.mxu0 %v271
      %302 = vmatpush.msra.mxu0 %v270
      %303 = vmatmul.f32.gmra.mxu0 %v279
      %v304 = vpop.f32.mrf.mxu0
      %v305 = vadd.f32 %v275, %v304
      %306 = vmatmul.f32.gmra.mxu0 %v282
      %v307 = vpop.f32.mrf.mxu0
      %v308 = vadd.f32 %v275, %v307
      %309 = vmatmul.f32.gmra.mxu0 %v285
      %v310 = vpop.f32.mrf.mxu0
      %v311 = vadd.f32 %v275, %v310
      %312 = vdwg.mxu0
      %v313 = vld [vmem:[%s3] sm:$0x1]
      %v315 = vperm.slane %v313, 0
      %v317 = vmul.f32 %v305, %v315
      %v318 = vmul.f32 %v308, %v315
      %v319 = vmul.f32 %v311, %v315
      %v320 = vld [vmem:[%s4] sm:$0x1]
      %v322 = vperm.slane %v320, 0
      %v324 = vadd.f32 %v317, %v322
      %v325 = vadd.f32 %v318, %v322
      %v326 = vadd.f32 %v319, %v322
      %327 = vst.msk [vmem:[%s224] sm:$0xff] %vm229, %v324
      %328 = vst.msk [vmem:[%s224 + $0x8] sm:$0xff] %vm229, %v325
      %329 = vst.msk [vmem:[%s224 + $0x10] sm:$0x3] %vm225, %v326
      %p330 = scmp.lt.s32.totalorder %s16, 1
      %s331 = scalar_select %p330, %s16, 1
      %s332 = smul.addr %s331, 3
      %s333 = smul.addr %s332, 8
      %s334 = scalar_lea.vmem %s5, %s333
      // Predicated region
      $region41: #{dilconv1d_forward.3} parent=39 // pred_check
        %p335 = pneg %p144
      $region42: #{dilconv1d_forward.3} parent=39 // pred_check_branch
        %337 = sbr.rel (%p335) target = $region44
      $region43: #{dilconv1d_forward.3} parent=39 // pred_region
        _
      $region44: #{dilconv1d_forward.3} parent=39 // pred_fallthru
        _
    $region40: #{dilconv1d_forward.3} parent=5 // pred_fallthru
      _
    %p338 = scmp.le.s32.totalorder 2, %s11
    // Predicated region
    $region45: #{dilconv1d_forward.3} parent=5 // pred_check
      %p339 = pneg %p338
    $region46: #{dilconv1d_forward.3} parent=5 // pred_check_branch
      %341 = sbr.rel (%p339) target = $region48
    $region47: #{dilconv1d_forward.3} parent=5 // pred_region
      %s342 = ssub.s32 %s11, 2
      // Predicated region
      $region49: #{dilconv1d_forward.3} parent=47 // pred_check
        %p343 = pneg %p150
      $region50: #{dilconv1d_forward.3} parent=47 // pred_check_branch
        %345 = sbr.rel (%p343) target = $region52
      $region51: #{dilconv1d_forward.3} parent=47 // pred_region
        %p346 = scmp.lt.s32.totalorder %s17, 1
        %s347 = scalar_select %p346, %s17, 1
        %s348 = smul.addr %s347, 3
        %s349 = smul.addr %s348, 8
        %s350 = scalar_lea.vmem %s5, %s349
      $region52: #{dilconv1d_forward.3} parent=47 // pred_fallthru
        _
    $region48: #{dilconv1d_forward.3} parent=5 // pred_fallthru
      _
  $region6: #{dilconv1d_forward.3} parent=0 // loop_footer
    %s15 = sadd.s32 1, %s11
  $region7: #{dilconv1d_forward.3} parent=0 // loop_footer_branch
    %10 = sbr.rel target = $region3
  $region8: #{dilconv1d_forward.3} parent=0 // loop_exit
    _

</llo_original>
